<compile_context>
chip_gen: v5e
topology: v5e:2x2
jax: 0.10.0
libtpu: 0.0.40
codegen_flags: <defaults>
</compile_context>

<pallas_src>
import functools

import jax
import jax.numpy as jnp
from jax.experimental import pallas as pl
from jax.experimental.pallas import tpu as pltpu


OUT_W = 8        # output lane width: 0:4 logits, 4 value, 5:7 zero pad
_HEAD_W = 128    # fused-head matmul width inside the kernel (lane-dense vregs)
_TB_MAX = 1024   # max batch-tile rows (multiple of 8)


def _round_up(x, m):
    return ((x + m - 1) // m) * m


def _choose_tb(B):
    """Batch tile: multiple of 8 (or == B when B < 8), >=2 grid steps when possible."""
    if B <= 8:
        return B
    if B <= 2 * _TB_MAX:
        # Split into (at least) two blocks so v7x's two TensorCores both get work.
        return _round_up(pl.cdiv(B, 2), 8)
    return _TB_MAX


# ---------------------------------------------------------------------------
# Kernel
# ---------------------------------------------------------------------------
def _make_ac_kernel(Lp, offs):
    """Kernel closure over static slab offsets (all 8-row aligned)."""
    o_w1, o_b1, o_w2, o_b2, o_wh, o_bh = offs

    def kernel(obs_ref, slab_ref, out_ref):
        obs = obs_ref[...]                                    # (TB, 6)

        # Static, tile-aligned views into the packed parameter slab.
        # Full 128-lane widths everywhere; zero-padded weight rows/cols make
        # the padded activation lanes (sigmoid(0)=0.5) contribute nothing.
        w1 = slab_ref[o_w1:o_w1 + 8, :][:6, :]                # (6, Lp)
        b1 = slab_ref[o_b1:o_b1 + 8, :][:1, :]                # (1, Lp)
        w2 = slab_ref[o_w2:o_w2 + Lp, :]                      # (Lp, Lp)
        b2 = slab_ref[o_b2:o_b2 + 8, :][:1, :]                # (1, Lp)
        wh = slab_ref[o_wh:o_wh + Lp, :_HEAD_W]               # (Lp, 128) fused heads
        bh = slab_ref[o_bh:o_bh + 8, :_HEAD_W][:1, :]         # (1, 128)

        def sigmoid(x):
            # exp on EUP, exact reciprocal (not VALU divide); kernel is not
            # EUP/VALU bound so exactness is free.
            return pl.reciprocal(1.0 + jnp.exp(-x), approx=False)

        h1 = sigmoid(jnp.dot(obs, w1, preferred_element_type=jnp.float32) + b1)
        h2 = sigmoid(jnp.dot(h1, w2, preferred_element_type=jnp.float32) + b2)

        # Fused actor+critic head (single MXU push), then store only the 8
        # useful output lanes -> lane-narrow output array, 16x less HBM write.
        head = jnp.dot(h2, wh, preferred_element_type=jnp.float32) + bh   # (TB, 128)
        out_ref[...] = head[:, :OUT_W].astype(out_ref.dtype)              # (TB, 8)

    return kernel


# ---------------------------------------------------------------------------
# Parameter packing: 8 tensors -> one (R, Lp) f32 slab (single resident DMA)
# ---------------------------------------------------------------------------
def pack_params(p):
    H = p["w1"].shape[1]
    Lp = _round_up(max(H, 1), 128)       # slab lane width / padded hidden width

    o_w1 = 0
    o_b1 = o_w1 + 8
    o_w2 = o_b1 + 8
    o_b2 = o_w2 + Lp
    o_wh = o_b2 + 8
    o_bh = o_wh + Lp
    R = o_bh + 8                         # e.g. H=32 -> (288, 128) f32 = 144 KiB

    slab = jnp.zeros((R, Lp), jnp.float32)
    slab = slab.at[o_w1:o_w1 + 6, :H].set(p["w1"])
    slab = slab.at[o_b1:o_b1 + 1, :H].set(p["b1"])
    slab = slab.at[o_w2:o_w2 + H, :H].set(p["w2"])
    slab = slab.at[o_b2:o_b2 + 1, :H].set(p["b2"])
    # fused head: cols [0:4] = actor, col [4] = critic, rest of the block zero
    slab = slab.at[o_wh:o_wh + H, 0:4].set(p["wa"])
    slab = slab.at[o_wh:o_wh + H, 4:5].set(p["wc"])
    slab = slab.at[o_bh:o_bh + 1, 0:4].set(p["ba"])
    slab = slab.at[o_bh:o_bh + 1, 4:5].set(p["bc"])

    meta = dict(H=H, Lp=Lp, offs=(o_w1, o_b1, o_w2, o_b2, o_wh, o_bh))
    return slab, meta


# ---------------------------------------------------------------------------
# Forward wrapper
# ---------------------------------------------------------------------------
@functools.partial(jax.jit, static_argnames=("Lp", "offs"))
def _forward_impl(obs, slab, *, Lp, offs):
    B = obs.shape[0]
    R = slab.shape[0]
    TB = _choose_tb(B)
    grid = (pl.cdiv(B, TB),)             # ragged last block handled by Pallas

    kernel = _make_ac_kernel(Lp, offs)

    out = pl.pallas_call(
        kernel,
        out_shape=jax.ShapeDtypeStruct((B, OUT_W), jnp.float32),
        grid=grid,
        in_specs=[
            pl.BlockSpec((TB, 6), lambda i: (i, 0)),       # obs tile
            pl.BlockSpec((R, Lp), lambda i: (0, 0)),       # weight slab, VMEM-resident
        ],
        out_specs=pl.BlockSpec((TB, OUT_W), lambda i: (i, 0)),
        compiler_params=pltpu.CompilerParams(
            dimension_semantics=("parallel",)),            # v7x: shard batch over 2 TCs
    )(obs, slab)
    return out


def simple_ac_net_forward(obs, slab, meta):
    """obs: (B, 6) float32. Returns (logits (B, 4), value (B, 1))."""
    out = _forward_impl(obs, slab, Lp=meta["Lp"], offs=meta["offs"])
    logits = out[:, :4]
    value = out[:, 4:5]
    return logits, value


# ---------------------------------------------------------------------------
# Init + pure-JAX reference
# ---------------------------------------------------------------------------
def init_params(key, hidden_size):
    """PyTorch nn.Linear-style init; weights stored transposed as (in, out)."""
    ks = jax.random.split(key, 8)

    def lin(kw, kb, fan_in, fan_out):
        bound = 1.0 / jnp.sqrt(jnp.float32(fan_in))
        w = jax.random.uniform(kw, (fan_in, fan_out), jnp.float32, -bound, bound)
        b = jax.random.uniform(kb, (1, fan_out), jnp.float32, -bound, bound)
        return w, b

    w1, b1 = lin(ks[0], ks[1], 6, hidden_size)
    w2, b2 = lin(ks[2], ks[3], hidden_size, hidden_size)
    wa, ba = lin(ks[4], ks[5], hidden_size, 4)
    wc, bc = lin(ks[6], ks[7], hidden_size, 1)
    return dict(w1=w1, b1=b1, w2=w2, b2=b2, wa=wa, ba=ba, wc=wc, bc=bc)


def reference_forward(obs, p):
    sig = lambda x: 1.0 / (1.0 + jnp.exp(-x))
    h1 = sig(obs @ p["w1"] + p["b1"])
    h2 = sig(h1 @ p["w2"] + p["b2"])
    return h2 @ p["wa"] + p["ba"], h2 @ p["wc"] + p["bc"]


if __name__ == "__main__":
    key = jax.random.PRNGKey(0)
    k_obs, k_par = jax.random.split(key)

    hidden_size = 32
    params = init_params(k_par, hidden_size)
    slab, meta = pack_params(params)

    # batch=8: single block; batch=100: >=2 grid steps + ragged final block.
    for batch in (8, 100):
        obs = jax.random.normal(jax.random.fold_in(k_obs, batch),
                                (batch, 6), jnp.float32)
        logits, value = simple_ac_net_forward(obs, slab, meta)
        logits, value = jax.block_until_ready((logits, value))

        ref_logits, ref_value = reference_forward(obs, params)
        assert logits.shape == (batch, 4) and value.shape == (batch, 1)
        assert jnp.allclose(logits, ref_logits, atol=1e-5, rtol=1e-5)
        assert jnp.allclose(value, ref_value, atol=1e-5, rtol=1e-5)

    print("KERNEL_OK")
</pallas_src>

<mosaic_0001>
module attributes {stable_mosaic.version = 11 : i64} {
  func.func @kernel(%arg0: i32, %arg1: memref<8x6xf32, #tpu.memory_space<vmem>>, %arg2: memref<288x128xf32, #tpu.memory_space<vmem>>, %arg3: memref<8x8xf32, #tpu.memory_space<vmem>>) attributes {dimension_semantics = [#tpu.dimension_semantics<parallel>], iteration_bounds = array<i64: 1>, scalar_prefetch = 0 : i64, scratch_operands = 0 : i64, tpu.core_type = #tpu.core_type<tc>, window_params = [{transform_indices = @transform_0, window_bounds = array<i64: 8, 6>}, {pipeline_mode = #tpu.pipeline_mode<synchronous>, transform_indices = @transform_1, window_bounds = array<i64: 288, 128>}, {transform_indices = @transform_2, window_bounds = array<i64: 8, 8>}]} {
    %c0 = arith.constant 0 : index
    %c0_0 = arith.constant 0 : index
    %0 = vector.load %arg1[%c0, %c0_0] : memref<8x6xf32, #tpu.memory_space<vmem>>, vector<8x6xf32>
    %c0_1 = arith.constant 0 : index
    %c0_2 = arith.constant 0 : index
    %1 = vector.load %arg2[%c0_1, %c0_2] : memref<288x128xf32, #tpu.memory_space<vmem>>, vector<8x128xf32>
    %2 = vector.extract_strided_slice %1 {offsets = [0, 0], sizes = [6, 128], strides = [1, 1]} : vector<8x128xf32> to vector<6x128xf32>
    %c8 = arith.constant 8 : index
    %c0_3 = arith.constant 0 : index
    %3 = vector.load %arg2[%c8, %c0_3] : memref<288x128xf32, #tpu.memory_space<vmem>>, vector<8x128xf32>
    %4 = vector.extract_strided_slice %3 {offsets = [0, 0], sizes = [1, 128], strides = [1, 1]} : vector<8x128xf32> to vector<1x128xf32>
    %c16 = arith.constant 16 : index
    %c0_4 = arith.constant 0 : index
    %5 = vector.load %arg2[%c16, %c0_4] : memref<288x128xf32, #tpu.memory_space<vmem>>, vector<128x128xf32>
    %c144 = arith.constant 144 : index
    %c0_5 = arith.constant 0 : index
    %6 = vector.load %arg2[%c144, %c0_5] : memref<288x128xf32, #tpu.memory_space<vmem>>, vector<8x128xf32>
    %7 = vector.extract_strided_slice %6 {offsets = [0, 0], sizes = [1, 128], strides = [1, 1]} : vector<8x128xf32> to vector<1x128xf32>
    %c152 = arith.constant 152 : index
    %c0_6 = arith.constant 0 : index
    %8 = vector.load %arg2[%c152, %c0_6] : memref<288x128xf32, #tpu.memory_space<vmem>>, vector<128x128xf32>
    %c280 = arith.constant 280 : index
    %c0_7 = arith.constant 0 : index
    %9 = vector.load %arg2[%c280, %c0_7] : memref<288x128xf32, #tpu.memory_space<vmem>>, vector<8x128xf32>
    %10 = vector.extract_strided_slice %9 {offsets = [0, 0], sizes = [1, 128], strides = [1, 1]} : vector<8x128xf32> to vector<1x128xf32>
    %cst = arith.constant dense<0.000000e+00> : vector<8x128xf32>
    %11 = tpu.matmul %0, %2, %cst {dimension_numbers = #tpu.dot_dimension_numbers<[1], [0], [0], [1], [0, 0, 1, 1], [], []>} : vector<8x6xf32>, vector<6x128xf32>, vector<8x128xf32> -> vector<8x128xf32>
    %12 = vector.broadcast %4 : vector<1x128xf32> to vector<8x128xf32>
    %13 = arith.addf %11, %12 : vector<8x128xf32>
    %cst_8 = arith.constant 0.000000e+00 : f32
    %14 = vector.broadcast %cst_8 : f32 to vector<8x128xf32>
    %15 = arith.subf %14, %13 : vector<8x128xf32>
    %16 = math.exp %15 : vector<8x128xf32>
    %cst_9 = arith.constant 1.000000e+00 : f32
    %17 = vector.broadcast %cst_9 : f32 to vector<8x128xf32>
    %18 = arith.addf %17, %16 : vector<8x128xf32>
    %19 = tpu.reciprocal %18 : vector<8x128xf32> -> vector<8x128xf32>
    %cst_10 = arith.constant dense<0.000000e+00> : vector<8x128xf32>
    %20 = tpu.matmul %19, %5, %cst_10 {dimension_numbers = #tpu.dot_dimension_numbers<[1], [0], [0], [1], [0, 0, 1, 1], [], []>} : vector<8x128xf32>, vector<128x128xf32>, vector<8x128xf32> -> vector<8x128xf32>
    %21 = vector.broadcast %7 : vector<1x128xf32> to vector<8x128xf32>
    %22 = arith.addf %20, %21 : vector<8x128xf32>
    %cst_11 = arith.constant 0.000000e+00 : f32
    %23 = vector.broadcast %cst_11 : f32 to vector<8x128xf32>
    %24 = arith.subf %23, %22 : vector<8x128xf32>
    %25 = math.exp %24 : vector<8x128xf32>
    %cst_12 = arith.constant 1.000000e+00 : f32
    %26 = vector.broadcast %cst_12 : f32 to vector<8x128xf32>
    %27 = arith.addf %26, %25 : vector<8x128xf32>
    %28 = tpu.reciprocal %27 : vector<8x128xf32> -> vector<8x128xf32>
    %cst_13 = arith.constant dense<0.000000e+00> : vector<8x128xf32>
    %29 = tpu.matmul %28, %8, %cst_13 {dimension_numbers = #tpu.dot_dimension_numbers<[1], [0], [0], [1], [0, 0, 1, 1], [], []>} : vector<8x128xf32>, vector<128x128xf32>, vector<8x128xf32> -> vector<8x128xf32>
    %30 = vector.broadcast %10 : vector<1x128xf32> to vector<8x128xf32>
    %31 = arith.addf %29, %30 : vector<8x128xf32>
    %32 = vector.extract_strided_slice %31 {offsets = [0, 0], sizes = [8, 8], strides = [1, 1]} : vector<8x128xf32> to vector<8x8xf32>
    %c0_14 = arith.constant 0 : index
    %c0_15 = arith.constant 0 : index
    %33 = vector.load %arg3[%c0_14, %c0_15] : memref<8x8xf32, #tpu.memory_space<vmem>>, vector<8x8xf32>
    tpu.vector_store %arg3[%c0_14, %c0_15], %32 {strides = array<i32>} : memref<8x8xf32, #tpu.memory_space<vmem>>, vector<8x8xf32>,
    return
  }
  func.func @transform_0(%arg0: i32) -> (i32, i32) {
    %c0_i32 = arith.constant 0 : i32
    %c0_i32_0 = arith.constant 0 : i32
    return %arg0, %c0_i32 : i32, i32
  }
  func.func @transform_1(%arg0: i32) -> (i32, i32) {
    %c0_i32 = arith.constant 0 : i32
    %c0_i32_0 = arith.constant 0 : i32
    %c0_i32_1 = arith.constant 0 : i32
    return %c0_i32, %c0_i32_0 : i32, i32
  }
  func.func @transform_2(%arg0: i32) -> (i32, i32) {
    %c0_i32 = arith.constant 0 : i32
    %c0_i32_0 = arith.constant 0 : i32
    return %arg0, %c0_i32 : i32, i32
  }
}

</mosaic_0001>

<llo_original>
// kernel: _forward_impl.1
$region0: #{_forward_impl.1}
  #allocation0 [shape = 'u32[]', space=smem, size = 0x4, offset = 0x4, fixed_abs, tag = 'smem constant byte address 0x4 - core index']
  #allocation1 [shape = 'u32[72,128]{1,0:T(1,128)}', space=vmem, size = 0x9000, scoped, tag = 'internal scratch']
  %s0 = inlined_call_operand.hbm [shape: f32[8,6], index: 0, kind: input, shape index: {}]
  %s1 = inlined_call_operand.hbm [shape: f32[288,128], index: 1, kind: input, shape index: {}]
  %s2 = inlined_call_operand.hbm [shape: f32[8,8], index: 2, kind: output, shape index: {}]
  %s3 = sld [smem:[#allocation0]]
  $region26: #{_forward_impl.1} parent=0
    _
  %s5 = ssub.s32 1, %s3
  %s6 = scalar_select 0, %s5, %s3
  $region1: #{_forward_impl.1} parent=0
    #allocation2 [shape = 'u8[4096]{0}', space=vmem, size = 0x1000, scoped, tag = 'input window, operand 0, single buffered']
    #allocation3 [shape = 's32[1]{0}', space=sflag, size = 0x4, scoped, tag = 'scoped memory for _forward_impl.1']
    #allocation4 [shape = 's32[1]{0}', space=sflag, size = 0x4, scoped, tag = 'scoped memory for _forward_impl.1']
    #allocation5 [shape = 'u8[147456]{0}', space=vmem, size = 0x24000, scoped, tag = 'input window, operand 1, single buffered']
    #allocation6 [shape = 's32[1]{0}', space=sflag, size = 0x4, scoped, tag = 'scoped memory for _forward_impl.1']
    #allocation7 [shape = 'u8[4096]{0}', space=vmem, size = 0x1000, scoped, tag = 'output window, operand 0, single buffered']
    %7 = vsyncpa [#allocation3], 0
    %8 = vsyncpa [#allocation6], 0
    %9 = vsyncpa [#allocation4], 0
    // Predicated region
    $region2: #{_forward_impl.1} parent=1 // pred_check
      _
    $region3: #{_forward_impl.1} parent=1 // pred_check_branch
      %11 = sbr.rel (0) target = $region5
    $region4: #{_forward_impl.1} parent=1 // pred_region
      %13 = vsyncadd [#allocation3], 0
      %s15 = sshll.u32 %s0, 4
      %s16 = int_to_ptr.hbm [resolvable:$true] %s15
      %s17 = sshll.u32 [#allocation2], 4
      %s18 = int_to_ptr.vmem [resolvable:$true] %s17
      %20 = dma.hbm_to_vmem [thread:$0]  %s16, 128, %s18, [#allocation3]
    $region5: #{_forward_impl.1} parent=1 // pred_fallthru
      _
    // Predicated region
    $region6: #{_forward_impl.1} parent=1 // pred_check
      _
    $region7: #{_forward_impl.1} parent=1 // pred_check_branch
      %22 = sbr.rel (0) target = $region9
    $region8: #{_forward_impl.1} parent=1 // pred_region
      %24 = vsyncadd [#allocation6], 0
      %s25 = sshll.u32 %s1, 4
      %s26 = int_to_ptr.hbm [resolvable:$true] %s25
      %s27 = sshll.u32 [#allocation5], 4
      %s28 = int_to_ptr.vmem [resolvable:$true] %s27
      %33 = dma.hbm_to_vmem [thread:$0]  %s26, 4608, %s28, [#allocation6], 128, 128, 8
    $region9: #{_forward_impl.1} parent=1 // pred_fallthru
      _
    // Predicated region
    $region10: #{_forward_impl.1} parent=1 // pred_check
      _
    $region11: #{_forward_impl.1} parent=1 // pred_check_branch
      %35 = sbr.rel (0) target = $region13
    $region12: #{_forward_impl.1} parent=1 // pred_region
      %37 = dma.done [#allocation3], 128
    $region13: #{_forward_impl.1} parent=1 // pred_fallthru
      _
    // Predicated region
    $region14: #{_forward_impl.1} parent=1 // pred_check
      _
    $region15: #{_forward_impl.1} parent=1 // pred_check_branch
      %39 = sbr.rel (0) target = $region17
    $region16: #{_forward_impl.1} parent=1 // pred_region
      %41 = dma.done [#allocation6], 4608
    $region17: #{_forward_impl.1} parent=1 // pred_fallthru
      _
    %v42 = vld [vmem:[#allocation2] sm:$0xff]
    %v43 = vld [vmem:[#allocation5] sm:$0xff]
    %v44 = vld [vmem:[#allocation5 + $0x8] sm:$0xff]
    %v45 = vld [vmem:[#allocation5 + $0x10] sm:$0xff]
    %v46 = vld [vmem:[#allocation5 + $0x18] sm:$0xff]
    %v47 = vld [vmem:[#allocation5 + $0x20] sm:$0xff]
    %v48 = vld [vmem:[#allocation5 + $0x28] sm:$0xff]
    %v49 = vld [vmem:[#allocation5 + $0x30] sm:$0xff]
    %v50 = vld [vmem:[#allocation5 + $0x38] sm:$0xff]
    %v51 = vld [vmem:[#allocation5 + $0x40] sm:$0xff]
    %v52 = vld [vmem:[#allocation5 + $0x48] sm:$0xff]
    %v53 = vld [vmem:[#allocation5 + $0x50] sm:$0xff]
    %v54 = vld [vmem:[#allocation5 + $0x58] sm:$0xff]
    %v55 = vld [vmem:[#allocation5 + $0x60] sm:$0xff]
    %v56 = vld [vmem:[#allocation5 + $0x68] sm:$0xff]
    %v57 = vld [vmem:[#allocation5 + $0x70] sm:$0xff]
    %v58 = vld [vmem:[#allocation5 + $0x78] sm:$0xff]
    %v59 = vld [vmem:[#allocation5 + $0x80] sm:$0xff]
    %v60 = vld [vmem:[#allocation5 + $0x88] sm:$0xff]
    %v61 = vld [vmem:[#allocation5 + $0x90] sm:$0xff]
    %v62 = vld [vmem:[#allocation5 + $0x98] sm:$0xff]
    %v63 = vld [vmem:[#allocation5 + $0xa0] sm:$0xff]
    %v64 = vld [vmem:[#allocation5 + $0xa8] sm:$0xff]
    %v65 = vld [vmem:[#allocation5 + $0xb0] sm:$0xff]
    %v66 = vld [vmem:[#allocation5 + $0xb8] sm:$0xff]
    %v67 = vld [vmem:[#allocation5 + $0xc0] sm:$0xff]
    %v68 = vld [vmem:[#allocation5 + $0xc8] sm:$0xff]
    %v69 = vld [vmem:[#allocation5 + $0xd0] sm:$0xff]
    %v70 = vld [vmem:[#allocation5 + $0xd8] sm:$0xff]
    %v71 = vld [vmem:[#allocation5 + $0xe0] sm:$0xff]
    %v72 = vld [vmem:[#allocation5 + $0xe8] sm:$0xff]
    %v73 = vld [vmem:[#allocation5 + $0xf0] sm:$0xff]
    %v74 = vld [vmem:[#allocation5 + $0xf8] sm:$0xff]
    %v75 = vld [vmem:[#allocation5 + $0x100] sm:$0xff]
    %v76 = vld [vmem:[#allocation5 + $0x108] sm:$0xff]
    %v77 = vld [vmem:[#allocation5 + $0x110] sm:$0xff]
    %v78 = vld [vmem:[#allocation5 + $0x118] sm:$0xff]
    %v79 = vperm.slane %v44, 0
    %vm80 = vcmask 48128
    %v82 = vsel %vm80, %v42, 0
    %vm84 = vcmask 1045504
    %v86 = vsel %vm84, %v43, 0
    %88 = vmatpush.msra.mxu0 0.0
    %89 = vmatpush.msra.mxu0 0.0
    %90 = vmatpush.msra.mxu0 0.0
    %91 = vmatpush.msra.mxu0 0.0
    %92 = vmatpush.msra.mxu0 0.0
    %93 = vmatpush.msra.mxu0 0.0
    %94 = vmatpush.msra.mxu0 0.0
    %95 = vmatpush.msra.mxu0 0.0
    %96 = vmatpush.msra.mxu0 0.0
    %97 = vmatpush.msra.mxu0 0.0
    %98 = vmatpush.msra.mxu0 0.0
    %99 = vmatpush.msra.mxu0 0.0
    %100 = vmatpush.msra.mxu0 0.0
    %101 = vmatpush.msra.mxu0 0.0
    %102 = vmatpush.msra.mxu0 0.0
    %103 = vmatpush.msra.mxu0 %v86
    %104 = vmatmul.f32.gmra.mxu0 %v82
    %v105 = vpop.f32.mrf.mxu0
    %v106 = vadd.f32 %v79, %v105
    %107 = vdwg.mxu0
    %v108 = vsub.f32 0.0, %v106
    %v109 = vmul.f32 %v108, 1.442695
    %v110 = vpow.pop %v109
    %v111 = vadd.f32 %v110, 1.0
    %v112 = vrcp.pop %v111
    %v113 = vmul.f32 %v111, %v112
    %v114 = vsub.f32 1.0, %v113
    %v115 = vmul.f32 %v112, %v114
    %v116 = vadd.f32 %v112, %v115
    %vm117 = vweird.f32 %v111
    %vm118 = vweird.f32 %v112
    %vm119 = vmor %vm117, %vm118
    %v120 = vsel %vm119, %v112, %v116
    %v121 = vand.u32 2147483647, %v111
    %vm122 = vcmp.eq.f32.partialorder %v121, 8.507059e+37
    %v123 = vand.u32 %v111, 2147483648
    %v124 = vor.u32 1.1754944e-38, %v123
    %v125 = vsel %vm122, %v124, %v120
    %v126 = vperm.slane %v61, 0
    %127 = vmatpush.msra.mxu0 %v60
    %128 = vmatpush.msra.mxu0 %v59
    %129 = vmatpush.msra.mxu0 %v58
    %130 = vmatpush.msra.mxu0 %v57
    %131 = vmatpush.msra.mxu0 %v56
    %132 = vmatpush.msra.mxu0 %v55
    %133 = vmatpush.msra.mxu0 %v54
    %134 = vmatpush.msra.mxu0 %v53
    %135 = vmatpush.msra.mxu0 %v52
    %136 = vmatpush.msra.mxu0 %v51
    %137 = vmatpush.msra.mxu0 %v50
    %138 = vmatpush.msra.mxu0 %v49
    %139 = vmatpush.msra.mxu0 %v48
    %140 = vmatpush.msra.mxu0 %v47
    %141 = vmatpush.msra.mxu0 %v46
    %142 = vmatpush.msra.mxu0 %v45
    %143 = vmatmul.f32.gmra.mxu0 %v125
    %v144 = vpop.f32.mrf.mxu0
    %v145 = vadd.f32 %v126, %v144
    %146 = vdwg.mxu0
    %v147 = vsub.f32 0.0, %v145
    %v148 = vmul.f32 %v147, 1.442695
    %v149 = vpow.pop %v148
    %v150 = vadd.f32 %v149, 1.0
    %v151 = vrcp.pop %v150
    %v152 = vmul.f32 %v150, %v151
    %v153 = vsub.f32 1.0, %v152
    %v154 = vmul.f32 %v151, %v153
    %v155 = vadd.f32 %v151, %v154
    %vm156 = vweird.f32 %v150
    %vm157 = vweird.f32 %v151
    %vm158 = vmor %vm156, %vm157
    %v159 = vsel %vm158, %v151, %v155
    %v160 = vand.u32 2147483647, %v150
    %vm161 = vcmp.eq.f32.partialorder %v160, 8.507059e+37
    %v162 = vand.u32 %v150, 2147483648
    %v163 = vor.u32 1.1754944e-38, %v162
    %v164 = vsel %vm161, %v163, %v159
    %v165 = vperm.slane %v78, 0
    %166 = vmatpush.msra.mxu0 %v77
    %167 = vmatpush.msra.mxu0 %v76
    %168 = vmatpush.msra.mxu0 %v75
    %169 = vmatpush.msra.mxu0 %v74
    %170 = vmatpush.msra.mxu0 %v73
    %171 = vmatpush.msra.mxu0 %v72
    %172 = vmatpush.msra.mxu0 %v71
    %173 = vmatpush.msra.mxu0 %v70
    %174 = vmatpush.msra.mxu0 %v69
    %175 = vmatpush.msra.mxu0 %v68
    %176 = vmatpush.msra.mxu0 %v67
    %177 = vmatpush.msra.mxu0 %v66
    %178 = vmatpush.msra.mxu0 %v65
    %179 = vmatpush.msra.mxu0 %v64
    %180 = vmatpush.msra.mxu0 %v63
    %181 = vmatpush.msra.mxu0 %v62
    %182 = vmatmul.f32.gmra.mxu0 %v164
    %v183 = vpop.f32.mrf.mxu0
    %v184 = vadd.f32 %v165, %v183
    %185 = vdwg.mxu0
    %vm186 = vcmask 64512
    %187 = vst.msk [vmem:[#allocation7] sm:$0xff] %vm186, %v184
    // Predicated region
    $region18: #{_forward_impl.1} parent=1 // pred_check
      _
    $region19: #{_forward_impl.1} parent=1 // pred_check_branch
      %189 = sbr.rel (0) target = $region21
    $region20: #{_forward_impl.1} parent=1 // pred_region
      %191 = vsyncadd [#allocation4], 0
      %s193 = sshll.u32 [#allocation7], 4
      %s194 = int_to_ptr.vmem [resolvable:$true] %s193
      %s195 = sshll.u32 %s2, 4
      %s196 = int_to_ptr.hbm [resolvable:$true] %s195
      %198 = dma.vmem_to_hbm [thread:$0]  %s194, 128, %s196, [#allocation4]
    $region21: #{_forward_impl.1} parent=1 // pred_fallthru
      _
    // Predicated region
    $region22: #{_forward_impl.1} parent=1 // pred_check
      _
    $region23: #{_forward_impl.1} parent=1 // pred_check_branch
      %200 = sbr.rel (0) target = $region25
    $region24: #{_forward_impl.1} parent=1 // pred_region
      %202 = dma.done [#allocation4], 128
    $region25: #{_forward_impl.1} parent=1 // pred_fallthru
      _
    %203 = vsyncpa [#allocation3], 1
    %204 = vsyncpa [#allocation6], 1
    %205 = vsyncpa [#allocation4], 1

</llo_original>
